<compile_context>
chip_gen: v7x
topology: tpu7x:2x2x1
jax: 0.10.0
libtpu: 0.0.40
codegen_flags: <defaults>
</compile_context>

<pallas_src>
import numpy as np
import jax
import jax.numpy as jnp
from jax.experimental import pallas as pl
from jax.experimental.pallas import tpu as pltpu


# ----------------------------------------------------------------------------
# Init-time host computation of the cyclic positional encoding table.
# (Faithful numpy port of the PyTorch reference; constructor-time work only.)
# ----------------------------------------------------------------------------
def _basesin(x, T, fai=0.0):
    return np.sin(2 * np.pi / T * np.abs(np.mod(x, 2 * T) - T) + fai)


def _basecos(x, T, fai=0.0):
    return np.cos(2 * np.pi / T * np.abs(np.mod(x, 2 * T) - T) + fai)


def cyclic_positional_encoding(n_position, emb_dim, mean_pooling=True, target_size=None):
    Td_set = np.linspace(
        np.power(n_position, 1 / (emb_dim // 2)), n_position, emb_dim // 2, dtype="int"
    )
    x = np.zeros((n_position, emb_dim))
    for i in range(emb_dim):
        Td = Td_set[i // 3 * 3 + 1] if i // 3 * 3 + 1 < emb_dim // 2 else Td_set[-1]
        fai = (
            0.0
            if i <= emb_dim // 2
            else 2 * np.pi * ((-i + emb_dim // 2) / (emb_dim // 2))
        )
        longer_pattern = np.arange(0, np.ceil(n_position / Td) * Td, 0.01)
        idx = np.linspace(0, len(longer_pattern), n_position, dtype="int", endpoint=False)
        if i % 2 == 1:
            x[:, i] = _basecos(longer_pattern, Td, fai)[idx]
        else:
            x[:, i] = _basesin(longer_pattern, Td, fai)[idx]

    pattern = x.astype(np.float32)  # matches torch .type(FloatTensor)
    if target_size is not None:
        sel = np.ceil(np.linspace(0, n_position - 1, target_size)).astype(int)
        pattern = pattern[sel]
        n_position = target_size
    pattern_sum = np.zeros_like(pattern)
    arange = np.arange(n_position)
    pooling = [0] if not mean_pooling else [-2, -1, 0, 1, 2]
    time = 0
    for i in pooling:
        time += 1
        index = (arange + i + n_position) % n_position
        pattern_sum += pattern[index]  # row gather == torch .gather(0, expanded index)
    pattern = (1.0 / time) * pattern_sum - pattern.mean(0)
    return pattern


# ----------------------------------------------------------------------------
# Pallas kernel: out[b, c] = x[b, c] + pattern_flat[c]   (flattened c = (s, d))
# ----------------------------------------------------------------------------
def _cpe_add_kernel(x_ref, pat_ref, o_ref):
    # x_ref/o_ref: (bt, tc); pat_ref: (1, tc) -> broadcasts over the batch rows.
    o_ref[...] = x_ref[...].astype(o_ref.dtype) + pat_ref[...].astype(o_ref.dtype)


def _pick_tiles(B, N, x_itemsize, out_itemsize, target_bytes):
    """Dtype-aware (bt, tc) block picker: bt = batch rows, tc = lane-dense columns."""
    sub = max(8, 32 // max(1, x_itemsize))          # 8 f32, 16 bf16, 32 int8/fp8
    row_bytes = x_itemsize + out_itemsize           # x + out bytes per element
    # Batch tile: fold the whole batch if cheap, else a multiple of the sublane pack.
    if B <= sub or B * 128 * row_bytes <= target_bytes:
        bt = B
    else:
        bt = (target_bytes // (128 * row_bytes)) // sub * sub
        bt = int(max(sub, min(bt, (B // sub) * sub)))
    # Column tile: multiple of 128 (lane-dense), or the full flattened axis.
    if N <= 128:
        tc = N
    else:
        tc = target_bytes // max(1, bt * row_bytes)
        tc = int(max(128, (tc // 128) * 128))
        if tc >= N:
            tc = N                                   # full-extent block (exception rule)
    return bt, tc


def cpe_broadcast_add(x, pattern, *, target_bytes=4 << 20):
    """x: (B, S, D); pattern: (S, D) fp32.  Returns x + pattern[None] in the
    promoted dtype (matches torch's fp32-table promotion semantics)."""
    B, S, D = x.shape
    assert pattern.shape == (S, D)
    out_dtype = jnp.result_type(x.dtype, pattern.dtype)

    N = S * D
    x2 = x.reshape(B, N)                  # free: contiguous row-major relabel
    pat2 = pattern.reshape(1, N)

    x_item = jnp.dtype(x.dtype).itemsize
    out_item = jnp.dtype(out_dtype).itemsize
    pat_item = jnp.dtype(pattern.dtype).itemsize
    bt, tc = _pick_tiles(B, N, x_item, out_item, target_bytes)

    grid = (pl.cdiv(N, tc), pl.cdiv(B, bt))   # columns outer, batch inner (pattern reuse)

    # Explicit scoped-VMEM budget: double-buffered x/out/pattern blocks + headroom,
    # capped well below v7x's 64 MiB physical VMEM.
    block_bytes = bt * tc * (x_item + out_item) + tc * pat_item
    vmem_limit = int(min(40 << 20, max(8 << 20, 4 * block_bytes)))

    out2 = pl.pallas_call(
        _cpe_add_kernel,
        out_shape=jax.ShapeDtypeStruct((B, N), out_dtype),
        grid_spec=pl.GridSpec(
            grid=grid,
            in_specs=[
                pl.BlockSpec((bt, tc), lambda c, b: (b, c)),  # x block
                pl.BlockSpec((1, tc), lambda c, b: (0, c)),   # shared pattern block
            ],
            out_specs=pl.BlockSpec((bt, tc), lambda c, b: (b, c)),
        ),
        compiler_params=pltpu.CompilerParams(
            dimension_semantics=("parallel", "parallel"),
            vmem_limit_bytes=vmem_limit,
        ),
    )(x2, pat2)
    return out2.reshape(B, S, D)


# ----------------------------------------------------------------------------
# Module wrapper (JAX/Pallas port of PositionalEncoding_Circular)
# ----------------------------------------------------------------------------
class PositionalEncodingCircular:
    """forward(x) -> (x + CPE[:S][None], CPE[:S][None]) — matches the PyTorch module."""

    def __init__(self, d_model, dropout, max_len=10000):
        self.d_model = d_model
        self.max_len = max_len
        self.dropout = dropout  # accepted but unused, exactly like the reference forward
        # Keep fp32 like torch's FloatTensor buffer; promotion happens in-kernel.
        self.pattern = jnp.asarray(
            cyclic_positional_encoding(max_len, d_model), dtype=jnp.float32
        )

    def __call__(self, x):
        B, S, D = x.shape
        assert D == self.d_model and S <= self.max_len
        cpe = self.pattern[:S, :]
        pe = cpe_broadcast_add(x, cpe)
        return pe, cpe[None, :, :]


if __name__ == "__main__":
    # --- main demo shapes --------------------------------------------------
    B, S, D = 2, 8, 32          # batch, seq, d_model
    MAX_LEN = 128               # small max_len keeps the host-side table build fast

    key = jax.random.PRNGKey(0)
    x = jax.random.normal(key, (B, S, D), dtype=jnp.float32)

    module = PositionalEncodingCircular(d_model=D, dropout=0.1, max_len=MAX_LEN)
    pe, cpe = module(x)
    jax.block_until_ready(pe)

    ref_cpe = module.pattern[:S, :]
    ref_pe = x + ref_cpe[None, :, :]
    assert pe.shape == (B, S, D) and cpe.shape == (1, S, D)
    assert jnp.allclose(pe, ref_pe, atol=1e-6, rtol=1e-6), "pe mismatch vs reference"
    assert jnp.array_equal(cpe, ref_cpe[None, :, :]), "cpe mismatch vs reference"

    # --- extra check: multi-tile / ragged column path (forced tiny tiles) ---
    S2 = 41                      # S2*D = 1312 -> 10 full 128-wide tiles + 1 partial
    x2 = jax.random.normal(jax.random.PRNGKey(1), (B, S2, D), dtype=jnp.float32)
    pat2 = module.pattern[:S2, :]
    pe2 = cpe_broadcast_add(x2, pat2, target_bytes=1024)
    jax.block_until_ready(pe2)
    assert jnp.allclose(pe2, x2 + pat2[None], atol=1e-6, rtol=1e-6), "tiled path mismatch"

    print("KERNEL_OK")
</pallas_src>

<mosaic_0001>
module attributes {stable_mosaic.version = 11 : i64} {
  func.func @_cpe_add_kernel(%arg0: i32, %arg1: i32, %arg2: memref<2x256xf32, #tpu.memory_space<vmem>>, %arg3: memref<1x256xf32, #tpu.memory_space<vmem>>, %arg4: memref<2x256xf32, #tpu.memory_space<vmem>>) attributes {dimension_semantics = [#tpu.dimension_semantics<parallel>, #tpu.dimension_semantics<parallel>], iteration_bounds = array<i64: 1, 1>, scalar_prefetch = 0 : i64, scratch_operands = 0 : i64, tpu.core_type = #tpu.core_type<tc>, window_params = [{transform_indices = @transform_0, window_bounds = array<i64: 2, 256>}, {transform_indices = @transform_1, window_bounds = array<i64: 1, 256>}, {transform_indices = @transform_2, window_bounds = array<i64: 2, 256>}]} {
    %c0 = arith.constant 0 : index
    %c0_0 = arith.constant 0 : index
    %0 = vector.load %arg2[%c0, %c0_0] : memref<2x256xf32, #tpu.memory_space<vmem>>, vector<2x256xf32>
    %c0_1 = arith.constant 0 : index
    %c0_2 = arith.constant 0 : index
    %1 = vector.load %arg3[%c0_1, %c0_2] : memref<1x256xf32, #tpu.memory_space<vmem>>, vector<1x256xf32>
    %2 = vector.broadcast %1 : vector<1x256xf32> to vector<2x256xf32>
    %3 = arith.addf %0, %2 : vector<2x256xf32>
    %c0_3 = arith.constant 0 : index
    %c0_4 = arith.constant 0 : index
    %4 = vector.load %arg4[%c0_3, %c0_4] : memref<2x256xf32, #tpu.memory_space<vmem>>, vector<2x256xf32>
    tpu.vector_store %arg4[%c0_3, %c0_4], %3 {strides = array<i32>} : memref<2x256xf32, #tpu.memory_space<vmem>>, vector<2x256xf32>,
    return
  }
  func.func @transform_0(%arg0: i32, %arg1: i32) -> (i32, i32) {
    %c0_i32 = arith.constant 0 : i32
    return %arg1, %arg0 : i32, i32
  }
  func.func @transform_1(%arg0: i32, %arg1: i32) -> (i32, i32) {
    %c0_i32 = arith.constant 0 : i32
    %c0_i32_0 = arith.constant 0 : i32
    return %c0_i32, %arg0 : i32, i32
  }
  func.func @transform_2(%arg0: i32, %arg1: i32) -> (i32, i32) {
    %c0_i32 = arith.constant 0 : i32
    return %arg1, %arg0 : i32, i32
  }
}

</mosaic_0001>

<llo_original>
// kernel: tpu_custom_call.1
$region0: #{tpu_custom_call.1}
  #allocation0 [shape = 'u32[]', space=smem, size = 0x4, offset = 0x4, fixed_abs, tag = 'smem constant byte address 0x4 - core index']
  #allocation1 [shape = 'u32[144,128]{1,0:T(1,128)}', space=vmem, size = 0x12000, scoped, tag = 'internal scratch']
  %s0 = inlined_call_operand.hbm [shape: f32[2,256], index: 0, kind: input, shape index: {}]
  %s1 = inlined_call_operand.vmem [shape: f32[1,256], index: 1, kind: input, shape index: {}]
  %s2 = inlined_call_operand.hbm [shape: f32[2,256], index: 2, kind: output, shape index: {}]
  %s3 = sld [smem:[#allocation0]]
  $region22: #{tpu_custom_call.1} parent=0
    _
  %s5 = ssub.s32 1, %s3
  %s6 = scalar_select 0, %s5, %s3
  $region1: #{tpu_custom_call.1} parent=0
    #allocation2 [shape = 'u8[2048]{0}', space=vmem, size = 0x800, scoped, tag = 'input window, operand 0, single buffered']
    #allocation3 [shape = 's32[1]{0}', space=sflag, size = 0x4, scoped, tag = 'scoped memory for tpu_custom_call.1']
    #allocation4 [shape = 's32[1]{0}', space=sflag, size = 0x4, scoped, tag = 'scoped memory for tpu_custom_call.1']
    #allocation5 [shape = 'u8[2048]{0}', space=vmem, size = 0x800, scoped, tag = 'output window, operand 0, single buffered']
    %7 = vsyncpa [#allocation3], 0
    %8 = vsyncpa [#allocation4], 0
    // Predicated region
    $region2: #{tpu_custom_call.1} parent=1 // pred_check
      _
    $region3: #{tpu_custom_call.1} parent=1 // pred_check_branch
      %10 = sbr.rel (0) target = $region5
    $region4: #{tpu_custom_call.1} parent=1 // pred_region
      %s12 = ssub.s32 64, 64
      %13 = vsyncadd [#allocation3], %s12
      %s15 = sshll.u32 [#allocation2], 4
      %s16 = int_to_ptr.vmem [resolvable:$true] %s15
      %18 = dma.hbm_to_vmem [thread:$0]  %s0, 64, %s16, [#allocation3]
    $region5: #{tpu_custom_call.1} parent=1 // pred_fallthru
      _
    // Predicated region
    $region6: #{tpu_custom_call.1} parent=1 // pred_check
      _
    $region7: #{tpu_custom_call.1} parent=1 // pred_check_branch
      %20 = sbr.rel (0) target = $region9
    $region8: #{tpu_custom_call.1} parent=1 // pred_region
      _
    $region9: #{tpu_custom_call.1} parent=1 // pred_fallthru
      _
    // Predicated region
    $region10: #{tpu_custom_call.1} parent=1 // pred_check
      _
    $region11: #{tpu_custom_call.1} parent=1 // pred_check_branch
      %22 = sbr.rel (0) target = $region13
    $region12: #{tpu_custom_call.1} parent=1 // pred_region
      %23 = dma.done [#allocation3], 64
    $region13: #{tpu_custom_call.1} parent=1 // pred_fallthru
      _
    %v24 = vld [vmem:[#allocation2] sm:$0xf]
    %v25 = vld [vmem:[%s1] sm:$0x3]
    %v27 = vlaneseq
    %v28 = vshrl.u32 %v27, 7
    %v29 = vsub.s32 0, %v28
    %v30 = vrot.slane %v25, %v29
    %v31 = vlaneseq
    %v32 = vshrl.u32 %v31, 7
    %v33 = vsub.s32 1, %v32
    %v34 = vrot.slane %v25, %v33
    %v35 = vcombine.low %v30, %v34
    %v37 = vunpack.c.l.s4 1983009808
    %v38 = vunpack.c.0.s8 %v37
    %v39 = vlaneseq
    %v40 = vshrl.u32 %v39, 7
    %v41 = vsub.s32 %v38, %v40
    %v42 = vrot.slane %v35, %v41
    %v44 = vadd.f32 %v24, %v42
    %45 = vst [vmem:[#allocation5] sm:$0xf] %v44
    // Predicated region
    $region14: #{tpu_custom_call.1} parent=1 // pred_check
      _
    $region15: #{tpu_custom_call.1} parent=1 // pred_check_branch
      %47 = sbr.rel (0) target = $region17
    $region16: #{tpu_custom_call.1} parent=1 // pred_region
      %s49 = ssub.s32 64, 64
      %50 = vsyncadd [#allocation4], %s49
      %s52 = sshll.u32 [#allocation5], 4
      %s53 = int_to_ptr.vmem [resolvable:$true] %s52
      %55 = dma.vmem_to_hbm [thread:$0]  %s53, 64, %s2, [#allocation4]
    $region17: #{tpu_custom_call.1} parent=1 // pred_fallthru
      _
    // Predicated region
    $region18: #{tpu_custom_call.1} parent=1 // pred_check
      _
    $region19: #{tpu_custom_call.1} parent=1 // pred_check_branch
      %57 = sbr.rel (0) target = $region21
    $region20: #{tpu_custom_call.1} parent=1 // pred_region
      %58 = dma.done [#allocation4], 64
    $region21: #{tpu_custom_call.1} parent=1 // pred_fallthru
      _
    %59 = vsyncpa [#allocation3], 1
    %60 = vsyncpa [#allocation4], 1

</llo_original>
